<compile_context>
chip_gen: v7x
topology: tpu7x:2x2x1
jax: 0.10.0
libtpu: 0.0.40
codegen_flags: <defaults>
</compile_context>

<pallas_src>
import functools

import jax
import jax.numpy as jnp
from jax import lax
from jax.experimental import pallas as pl
from jax.experimental.pallas import tpu as pltpu

LANE = 128  # lane width: channel dims are padded to a multiple of this.


# ---------------------------------------------------------------------------
# Small helpers
# ---------------------------------------------------------------------------
def _round_up(x, m):
    return (x + m - 1) // m * m


def _vmem_capacity_bytes():
    try:
        cap = getattr(pltpu.get_tpu_info(), "vmem_capacity_bytes", None)
        if cap:
            return int(cap)
    except Exception:
        pass
    return 64 << 20          # conservative default (v7x per-core VMEM)


# Generation-aware budgets: ~54 MiB scoped VMEM on v7x (64 MiB/TC),
# ~109 MiB on v5e/v6e (128 MiB physical) -> larger tiles where it matters.
_VMEM_LIMIT = int(_vmem_capacity_bytes() * 0.85)
_TILE_BUDGET = _VMEM_LIMIT // 4   # per-block working set (double buffering etc.)

_ROW_TILES = (4096, 2048, 1024, 512, 256, 128, 64, 32, 16, 8)


def _pick_tile(m, row_bytes, *, budget=_TILE_BUDGET, min_steps=2):
    """Largest row tile fitting `budget`; prefer >= min_steps grid steps."""
    fitting = [t for t in _ROW_TILES if t * row_bytes <= budget] or [8]
    for t in fitting:
        if m % t == 0 and m // t >= min_steps:
            return t
    for t in fitting:
        if m % t == 0:
            return t
    for t in fitting:
        if t <= m:
            return t          # caller pads rows up to a multiple of t
    return fitting[-1]


def _pick_frame_tile(f, per_frame_bytes, *, budget=_TILE_BUDGET, min_steps=2):
    choice = 1
    for ft in (1, 2, 4, 8, 16, 32, 64):
        if ft > f or f % ft != 0 or ft * per_frame_bytes > budget:
            continue
        if f // ft >= min_steps:
            choice = ft
    return choice


# ---------------------------------------------------------------------------
# Kernels
# ---------------------------------------------------------------------------
def _pointwise_kernel(*refs, relu, has_res):
    # x: (TM, Cin), w: (Cin, Cout) bf16 (BN scale folded in), shift: (1, Cout)
    # optional res: (TM, Cout), out: (TM, Cout)
    if has_res:
        x_ref, w_ref, shift_ref, res_ref, o_ref = refs
    else:
        x_ref, w_ref, shift_ref, o_ref = refs
        res_ref = None
    y = jnp.dot(x_ref[...].astype(jnp.bfloat16), w_ref[...],
                preferred_element_type=jnp.float32)
    y = y + shift_ref[...]
    if has_res:
        y = y + res_ref[...].astype(jnp.float32)
    if relu:
        y = jnp.maximum(y, 0.0)
    o_ref[...] = y.astype(o_ref.dtype)


def _spatial_kernel(x_ref, w_ref, shift_ref, o_ref, *, stride, relu):
    # (1,3,3) conv, pad (1,1), stride (s,s): 9 tap-accumulated matmuls.
    # x: (FT, H, W, Cin); w: (9, Cin, Cout) bf16; out: (FT, Ho, Wo, Cout).
    # The H/W halo is built in-register (zero concat), not in HBM.
    ft, h, w, cin = x_ref.shape
    _, ho, wo, cout = o_ref.shape
    x = x_ref[...].astype(jnp.bfloat16)
    zc = jnp.zeros((ft, h, 1, cin), jnp.bfloat16)
    xp = jnp.concatenate([zc, x, zc], axis=2)           # pad W
    zr = jnp.zeros((ft, 1, w + 2, cin), jnp.bfloat16)
    xp = jnp.concatenate([zr, xp, zr], axis=1)          # pad H -> (FT,H+2,W+2,Cin)

    acc = None
    for kh in range(3):
        for kw in range(3):
            if stride == 1:
                xs = xp[:, kh:kh + ho, kw:kw + wo, :]
            else:
                # TODO(synk): stride=2 uses sublane-strided slices; de-interleave
                # even/odd planes wrapper-side if this path becomes hot.
                xs = lax.slice(
                    xp, (0, kh, kw, 0),
                    (ft, kh + (ho - 1) * stride + 1,
                     kw + (wo - 1) * stride + 1, cin),
                    (1, stride, stride, 1))
            t = jnp.dot(xs.reshape(ft * ho * wo, cin), w_ref[kh * 3 + kw],
                        preferred_element_type=jnp.float32)
            acc = t if acc is None else acc + t
    y = acc + shift_ref[...]
    if relu:
        y = jnp.maximum(y, 0.0)
    o_ref[...] = y.reshape(ft, ho, wo, cout).astype(o_ref.dtype)


def _temporal_kernel(*refs, stride, relu, has_res):
    # (3,1,1) conv, pad (1,0,0), stride (s,1,1): 3 tap-accumulated matmuls.
    # x: (1, D, MT, Cin); w: (3, Cin, Cout) bf16; out: (1, Do, MT, Cout);
    # acc scratch: (Do, MT, Cout) f32.  The D halo is handled with truncated
    # output-row ranges per tap (no zero-padded copy).
    if has_res:
        x_ref, w_ref, shift_ref, res_ref, o_ref, acc_ref = refs
    else:
        x_ref, w_ref, shift_ref, o_ref, acc_ref = refs
        res_ref = None
    _, do, mt, cout = o_ref.shape
    d = x_ref.shape[1]
    cin = x_ref.shape[3]
    x = x_ref[0].astype(jnp.bfloat16)                    # (D, MT, Cin)

    for k in (1, 0, 2):                                  # centre tap first (full init)
        dd = k - 1
        od_lo = (max(0, -dd) + stride - 1) // stride
        od_hi = min(do, (d - 1 - dd) // stride + 1)
        n_od = od_hi - od_lo
        if n_od <= 0:
            continue
        id_lo = od_lo * stride + dd
        if stride == 1:
            xs = x[id_lo:id_lo + n_od]
        else:
            xs = lax.slice(x, (id_lo, 0, 0),
                           (id_lo + (n_od - 1) * stride + 1, mt, cin),
                           (stride, 1, 1))
        t = jnp.dot(xs.reshape(n_od * mt, cin), w_ref[k],
                    preferred_element_type=jnp.float32).reshape(n_od, mt, cout)
        if k == 1:                                       # covers the whole output
            acc_ref[...] = t
        else:
            acc_ref[od_lo:od_hi] += t

    y = acc_ref[...].reshape(do * mt, cout) + shift_ref[...]
    if has_res:
        y = y + res_ref[...].reshape(do * mt, cout).astype(jnp.float32)
    if relu:
        y = jnp.maximum(y, 0.0)
    o_ref[...] = y.reshape(1, do, mt, cout).astype(o_ref.dtype)


# ---------------------------------------------------------------------------
# Wrappers (glue: tiling / BlockSpecs)
# ---------------------------------------------------------------------------
def pointwise_conv_bn(x2d, w2d, shift, *, relu, residual=None,
                      out_dtype=jnp.bfloat16):
    """1x1x1 conv + folded-BN shift (+fused residual add / ReLU). x2d: (M,Cin)."""
    m, cin = x2d.shape
    cout = w2d.shape[1]
    row_bytes = (cin * x2d.dtype.itemsize + cout * 4
                 + cout * jnp.dtype(out_dtype).itemsize
                 + (cout * residual.dtype.itemsize if residual is not None else 0))
    tm = _pick_tile(m, row_bytes)
    mp = _round_up(m, tm)
    if mp != m:
        # TODO(synk): mask a partial last tile instead of padding rows.
        x2d = jnp.pad(x2d, ((0, mp - m), (0, 0)))
        if residual is not None:
            residual = jnp.pad(residual, ((0, mp - m), (0, 0)))
    grid = (mp // tm,)

    in_specs = [pl.BlockSpec((tm, cin), lambda i: (i, 0)),
                pl.BlockSpec((cin, cout), lambda i: (0, 0)),
                pl.BlockSpec((1, cout), lambda i: (0, 0))]
    args = [x2d, w2d, shift]
    if residual is not None:
        in_specs.append(pl.BlockSpec((tm, cout), lambda i: (i, 0)))
        args.append(residual)

    out = pl.pallas_call(
        functools.partial(_pointwise_kernel, relu=relu,
                          has_res=residual is not None),
        out_shape=jax.ShapeDtypeStruct((mp, cout), out_dtype),
        grid_spec=pltpu.PrefetchScalarGridSpec(
            num_scalar_prefetch=0, grid=grid,
            in_specs=in_specs,
            out_specs=pl.BlockSpec((tm, cout), lambda i: (i, 0))),
        compiler_params=pltpu.CompilerParams(
            dimension_semantics=("parallel",),
            vmem_limit_bytes=_VMEM_LIMIT),
    )(*args)
    return out[:m] if mp != m else out


def spatial_conv_bn(x, w9, shift, *, stride, relu, out_dtype=jnp.bfloat16):
    """(1,3,3) conv, padding (0,1,1), stride (1,s,s). x: (N,D,H,W,Cin)."""
    n, d, h, wd, cin = x.shape
    cout = w9.shape[-1]
    ho = (h + 2 - 3) // stride + 1
    wo = (wd + 2 - 3) // stride + 1
    f = n * d
    xf = x.reshape(f, h, wd, cin)

    per_frame = (h * wd * cin * x.dtype.itemsize         # input block
                 + (h + 2) * (wd + 2) * cin * 2          # in-register padded copy
                 + ho * wo * cin * 2                      # one tap slice (bf16)
                 + ho * wo * cout * 4                     # f32 accumulator
                 + ho * wo * cout * jnp.dtype(out_dtype).itemsize)
    ft = _pick_frame_tile(f, per_frame)
    grid = (f // ft,)

    out = pl.pallas_call(
        functools.partial(_spatial_kernel, stride=stride, relu=relu),
        out_shape=jax.ShapeDtypeStruct((f, ho, wo, cout), out_dtype),
        grid_spec=pltpu.PrefetchScalarGridSpec(
            num_scalar_prefetch=0, grid=grid,
            in_specs=[pl.BlockSpec((ft, h, wd, cin), lambda i: (i, 0, 0, 0)),
                      pl.BlockSpec((9, cin, cout), lambda i: (0, 0, 0)),
                      pl.BlockSpec((1, cout), lambda i: (0, 0))],
            out_specs=pl.BlockSpec((ft, ho, wo, cout),
                                   lambda i: (i, 0, 0, 0))),
        compiler_params=pltpu.CompilerParams(
            dimension_semantics=("parallel",),
            vmem_limit_bytes=_VMEM_LIMIT),
    )(xf, w9, shift)
    return out.reshape(n, d, ho, wo, cout)


def temporal_conv_bn(x, w3, shift, *, stride, relu, residual=None,
                     out_dtype=jnp.bfloat16):
    """(3,1,1) conv, padding (1,0,0), stride (s,1,1), optional fused residual.
    x: (N,D,H,W,Cin); residual (if given): same shape as the conv output."""
    n, d, h, wd, cin = x.shape
    cout = w3.shape[-1]
    do = (d + 2 - 3) // stride + 1
    m = h * wd
    x4 = x.reshape(n, d, m, cin)
    res4 = residual.reshape(n, do, m, cout) if residual is not None else None

    col_bytes = (d * cin * x.dtype.itemsize
                 + do * cin * 2                           # one tap slice (bf16)
                 + 2 * do * cout * 4                      # f32 acc + contribution
                 + do * cout * jnp.dtype(out_dtype).itemsize
                 + (do * cout * residual.dtype.itemsize
                    if residual is not None else 0))
    mt = _pick_tile(m, col_bytes, min_steps=1 if n >= 2 else 2)
    mp = _round_up(m, mt)
    if mp != m:
        x4 = jnp.pad(x4, ((0, 0), (0, 0), (0, mp - m), (0, 0)))
        if res4 is not None:
            res4 = jnp.pad(res4, ((0, 0), (0, 0), (0, mp - m), (0, 0)))
    grid = (n, mp // mt)

    in_specs = [pl.BlockSpec((1, d, mt, cin), lambda b, j: (b, 0, j, 0)),
                pl.BlockSpec((3, cin, cout), lambda b, j: (0, 0, 0)),
                pl.BlockSpec((1, cout), lambda b, j: (0, 0))]
    args = [x4, w3, shift]
    if res4 is not None:
        in_specs.append(pl.BlockSpec((1, do, mt, cout),
                                     lambda b, j: (b, 0, j, 0)))
        args.append(res4)

    out = pl.pallas_call(
        functools.partial(_temporal_kernel, stride=stride, relu=relu,
                          has_res=residual is not None),
        out_shape=jax.ShapeDtypeStruct((n, do, mp, cout), out_dtype),
        grid_spec=pltpu.PrefetchScalarGridSpec(
            num_scalar_prefetch=0, grid=grid,
            in_specs=in_specs,
            out_specs=pl.BlockSpec((1, do, mt, cout),
                                   lambda b, j: (b, 0, j, 0)),
            scratch_shapes=[pltpu.VMEM((do, mt, cout), jnp.float32)]),
        compiler_params=pltpu.CompilerParams(
            dimension_semantics=("parallel", "parallel"),
            vmem_limit_bytes=_VMEM_LIMIT),
    )(*args)
    if mp != m:
        out = out[:, :, :m, :]
    return out.reshape(n, do, h, wd, cout)


# ---------------------------------------------------------------------------
# Parameters: fold BN into (scaled weight, shift), pad channels, cast to bf16
# ---------------------------------------------------------------------------
def make_block_params(key, cin, cout, ksize, eps=1e-3):
    ks = jax.random.split(key, 6)
    w = jax.random.normal(ks[0], (*ksize, cin, cout), jnp.float32) * 0.1  # DHWIO
    b = jax.random.normal(ks[1], (cout,), jnp.float32) * 0.1
    gamma = 1.0 + 0.1 * jax.random.normal(ks[2], (cout,), jnp.float32)
    beta = 0.1 * jax.random.normal(ks[3], (cout,), jnp.float32)
    mean = 0.1 * jax.random.normal(ks[4], (cout,), jnp.float32)
    var = jax.random.uniform(ks[5], (cout,), jnp.float32, 0.5, 1.5)
    scale = gamma / jnp.sqrt(var + eps)
    w_fold = w * scale                       # fold BN scale into the conv weight
    shift = (b - mean) * scale + beta
    return w_fold, shift


def prepare_params(folded):
    """Pad channels to LANE multiples, split taps ((kd*kh*kw), CinP, CoutP),
    cast weights to bf16, keep the per-channel shift in f32."""
    prep = {}
    for name, (w, sh) in folded.items():
        kd, kh, kw, cin, cout = w.shape
        cinp, coutp = _round_up(cin, LANE), _round_up(cout, LANE)
        taps = kd * kh * kw
        wp = jnp.zeros((taps, cinp, coutp), jnp.float32)
        wp = wp.at[:, :cin, :cout].set(w.reshape(taps, cin, cout))
        shp = jnp.zeros((1, coutp), jnp.float32).at[0, :cout].set(sh)
        prep[name] = (wp.astype(jnp.bfloat16), shp)
    return prep


# ---------------------------------------------------------------------------
# P3DBlock forward (glue composing the Pallas kernels)
# ---------------------------------------------------------------------------
def p3d_block_forward(x, prep, *, block_type="A", stride=1):
    """x: (N, D, H, W, CinP) f32 NDHWC, channel-padded. Returns channel-padded
    (N, D', H', W', CoutP) f32."""
    n, d, h, w, cinp = x.shape
    w1, b1 = prep["conv1"]
    cmidp = w1.shape[-1]

    f = pointwise_conv_bn(x.reshape(-1, cinp), w1.reshape(cinp, cmidp), b1,
                          relu=True)
    f = f.reshape(n, d, h, w, cmidp)

    w2, b2 = prep["conv2d"]
    wt, bt = prep["conv1d"]
    if block_type == "A":
        f = spatial_conv_bn(f, w2, b2, stride=stride, relu=True)
        f = temporal_conv_bn(f, wt, bt, stride=stride, relu=True)
    elif block_type == "B":
        # scalar stride applies to (D,H,W); size-1 kernel dims subsampled
        # wrapper-side.  TODO(synk): fold ::stride into the consumer BlockSpec
        # index_map instead of an XLA gather pass (only matters for stride=2).
        fs = f if stride == 1 else f[:, ::stride]
        f2 = spatial_conv_bn(fs, w2, b2, stride=stride, relu=True)
        ftin = f if stride == 1 else f[:, :, ::stride, ::stride]
        # relu(conv1d_bn(f) + f2) fused inside the temporal kernel.
        f = temporal_conv_bn(ftin, wt, bt, stride=stride, relu=True,
                             residual=f2)
    elif block_type == "C":
        fs = f if stride == 1 else f[:, ::stride]
        f2 = spatial_conv_bn(fs, w2, b2, stride=stride, relu=True)
        # relu(f2 + conv1d_bn(f2)) fused inside the temporal kernel.
        f = temporal_conv_bn(f2, wt, bt, stride=1, relu=True, residual=f2)
    else:
        raise ValueError("BlockType must be A, B or C.")

    w3, b3 = prep["conv3"]
    coutp = w3.shape[-1]
    n2, d2, h2, w2_, _ = f.shape

    if "down" in prep:
        wd_, bd_ = prep["down"]
        xs = x if stride == 1 else x[:, ::stride, ::stride, ::stride]
        res = pointwise_conv_bn(xs.reshape(-1, cinp), wd_.reshape(cinp, coutp),
                                bd_, relu=False)
    else:
        res = x.reshape(-1, cinp)     # identity: stride==1 and cinp==coutp

    # conv3 + BN shift + residual add + final ReLU fused into one kernel pass.
    out = pointwise_conv_bn(f.reshape(-1, cmidp), w3.reshape(cmidp, coutp),
                            b3, relu=True, residual=res, out_dtype=jnp.float32)
    return out.reshape(n2, d2, h2, w2_, coutp)


# ---------------------------------------------------------------------------
# Pure-JAX reference (lax conv) mirroring the kernel's bf16 quantization
# (bf16 MXU inputs and bf16-stored inter-stage activations / residuals)
# ---------------------------------------------------------------------------
def _q(a):
    return a.astype(jnp.bfloat16).astype(jnp.float32)


def _ref_block(x, p, strides, padding, relu):
    w, sh = p
    y = lax.conv_general_dilated(
        _q(x), _q(w), window_strides=strides,
        padding=[(pp, pp) for pp in padding],
        dimension_numbers=("NDHWC", "DHWIO", "NDHWC"))
    y = y + sh
    return jnp.maximum(y, 0.0) if relu else y


def ref_forward(x, params, *, block_type="A", stride=1):
    f = _ref_block(x, params["conv1"], (1, 1, 1), (0, 0, 0), True)
    if block_type == "A":
        f = _ref_block(f, params["conv2d"], (1, stride, stride), (0, 1, 1), True)
        f = _ref_block(f, params["conv1d"], (stride, 1, 1), (1, 0, 0), True)
    elif block_type == "B":
        f2 = _ref_block(f, params["conv2d"], (stride,) * 3, (0, 1, 1), True)
        f1 = _ref_block(f, params["conv1d"], (stride,) * 3, (1, 0, 0), False)
        f = jnp.maximum(f1 + _q(f2), 0.0)      # kernel adds the bf16-stored f2
    else:
        f2 = _ref_block(f, params["conv2d"], (stride,) * 3, (0, 1, 1), True)
        f1 = _ref_block(f2, params["conv1d"], (1, 1, 1), (1, 0, 0), False)
        f = jnp.maximum(_q(f2) + f1, 0.0)
    f = _ref_block(f, params["conv3"], (1, 1, 1), (0, 0, 0), False)
    if "down" in params:
        res = _q(_ref_block(x, params["down"], (stride,) * 3, (0, 0, 0), False))
    else:
        res = x
    return jnp.maximum(res + f, 0.0)


# ---------------------------------------------------------------------------
if __name__ == "__main__":
    key = jax.random.PRNGKey(0)
    n, cin, d, h, w = 2, 4, 4, 8, 8
    out_channel, stride, block_type = 4, 1, "A"
    bottleneck = 4 * out_channel

    ks = jax.random.split(key, 6)
    raw = {
        "conv1": make_block_params(ks[0], cin, out_channel, (1, 1, 1)),
        "conv2d": make_block_params(ks[1], out_channel, out_channel, (1, 3, 3)),
        "conv1d": make_block_params(ks[2], out_channel, out_channel, (3, 1, 1)),
        "conv3": make_block_params(ks[3], out_channel, bottleneck, (1, 1, 1)),
    }
    if stride != 1 or cin != bottleneck:
        raw["down"] = make_block_params(ks[4], cin, bottleneck, (1, 1, 1))

    x_ncdhw = jax.random.normal(ks[5], (n, cin, d, h, w), jnp.float32)
    x = jnp.transpose(x_ncdhw, (0, 2, 3, 4, 1))           # NCDHW -> NDHWC

    prep = prepare_params(raw)
    cinp = _round_up(cin, LANE)
    x_p = jnp.pad(x, ((0, 0),) * 4 + ((0, cinp - cin),))  # lane-pad channels

    out_p = p3d_block_forward(x_p, prep, block_type=block_type, stride=stride)
    out_p = jax.block_until_ready(out_p)
    out = out_p[..., :bottleneck]                          # strip channel pad

    ref = ref_forward(x, raw, block_type=block_type, stride=stride)
    assert out.shape == ref.shape, (out.shape, ref.shape)
    err = float(jnp.max(jnp.abs(out - ref)))
    assert jnp.allclose(out, ref, atol=3e-3, rtol=3e-3), err

    # back to PyTorch layout if needed downstream
    _ = jnp.transpose(out, (0, 4, 1, 2, 3))
    print("KERNEL_OK")
</pallas_src>

<mosaic_0001>
module attributes {stable_mosaic.version = 11 : i64} {
  func.func @_pointwise_kernel(%arg0: i32, %arg1: memref<256x128xf32, #tpu.memory_space<vmem>>, %arg2: memref<128x128xbf16, #tpu.memory_space<vmem>>, %arg3: memref<1x128xf32, #tpu.memory_space<vmem>>, %arg4: memref<256x128xbf16, #tpu.memory_space<vmem>>) attributes {dimension_semantics = [#tpu.dimension_semantics<parallel>], iteration_bounds = array<i64: 2>, scalar_prefetch = 0 : i64, scratch_operands = 0 : i64, tpu.core_type = #tpu.core_type<tc>, window_params = [{transform_indices = @transform_0, window_bounds = array<i64: 256, 128>}, {pipeline_mode = #tpu.pipeline_mode<synchronous>, transform_indices = @transform_1, window_bounds = array<i64: 128, 128>}, {pipeline_mode = #tpu.pipeline_mode<synchronous>, transform_indices = @transform_2, window_bounds = array<i64: 1, 128>}, {transform_indices = @transform_3, window_bounds = array<i64: 256, 128>}]} {
    %c0 = arith.constant 0 : index
    %c0_0 = arith.constant 0 : index
    %0 = vector.load %arg1[%c0, %c0_0] : memref<256x128xf32, #tpu.memory_space<vmem>>, vector<256x128xf32>
    %1 = arith.truncf %0 : vector<256x128xf32> to vector<256x128xbf16>
    %c0_1 = arith.constant 0 : index
    %c0_2 = arith.constant 0 : index
    %2 = vector.load %arg2[%c0_1, %c0_2] : memref<128x128xbf16, #tpu.memory_space<vmem>>, vector<128x128xbf16>
    %cst = arith.constant dense<0.000000e+00> : vector<256x128xf32>
    %3 = tpu.matmul %1, %2, %cst {dimension_numbers = #tpu.dot_dimension_numbers<[1], [0], [0], [1], [0, 0, 1, 1], [], []>} : vector<256x128xbf16>, vector<128x128xbf16>, vector<256x128xf32> -> vector<256x128xf32>
    %c0_3 = arith.constant 0 : index
    %c0_4 = arith.constant 0 : index
    %4 = vector.load %arg3[%c0_3, %c0_4] : memref<1x128xf32, #tpu.memory_space<vmem>>, vector<1x128xf32>
    %5 = vector.broadcast %4 : vector<1x128xf32> to vector<256x128xf32>
    %6 = arith.addf %3, %5 : vector<256x128xf32>
    %cst_5 = arith.constant 0.000000e+00 : f32
    %7 = vector.broadcast %cst_5 : f32 to vector<256x128xf32>
    %8 = arith.maximumf %6, %7 : vector<256x128xf32>
    %9 = arith.truncf %8 : vector<256x128xf32> to vector<256x128xbf16>
    %c0_6 = arith.constant 0 : index
    %c0_7 = arith.constant 0 : index
    %10 = vector.load %arg4[%c0_6, %c0_7] : memref<256x128xbf16, #tpu.memory_space<vmem>>, vector<256x128xbf16>
    tpu.vector_store %arg4[%c0_6, %c0_7], %9 {strides = array<i32>} : memref<256x128xbf16, #tpu.memory_space<vmem>>, vector<256x128xbf16>,
    return
  }
  func.func @transform_0(%arg0: i32) -> (i32, i32) {
    %c0_i32 = arith.constant 0 : i32
    %c0_i32_0 = arith.constant 0 : i32
    return %arg0, %c0_i32 : i32, i32
  }
  func.func @transform_1(%arg0: i32) -> (i32, i32) {
    %c0_i32 = arith.constant 0 : i32
    %c0_i32_0 = arith.constant 0 : i32
    %c0_i32_1 = arith.constant 0 : i32
    return %c0_i32, %c0_i32_0 : i32, i32
  }
  func.func @transform_2(%arg0: i32) -> (i32, i32) {
    %c0_i32 = arith.constant 0 : i32
    %c0_i32_0 = arith.constant 0 : i32
    %c0_i32_1 = arith.constant 0 : i32
    return %c0_i32, %c0_i32_0 : i32, i32
  }
  func.func @transform_3(%arg0: i32) -> (i32, i32) {
    %c0_i32 = arith.constant 0 : i32
    %c0_i32_0 = arith.constant 0 : i32
    return %arg0, %c0_i32 : i32, i32
  }
}

</mosaic_0001>

<llo_original>
// kernel: tpu_custom_call.1
$region0: #{tpu_custom_call.1}
  #allocation0 [shape = 'u32[]', space=smem, size = 0x4, offset = 0x4, fixed_abs, tag = 'smem constant byte address 0x4 - core index']
  #allocation1 [shape = 'u32[144,128]{1,0:T(1,128)}', space=vmem, size = 0x12000, scoped, tag = 'internal scratch']
  %s0 = inlined_call_operand.hbm [shape: f32[512,128], index: 0, kind: input, shape index: {}]
  %s1 = inlined_call_operand.hbm [shape: bf16[128,128], index: 1, kind: input, shape index: {}]
  %s2 = inlined_call_operand.vmem [shape: f32[1,128], index: 2, kind: input, shape index: {}]
  %s3 = inlined_call_operand.hbm [shape: bf16[512,128], index: 3, kind: output, shape index: {}]
  %s4 = sld [smem:[#allocation0]]
  $region53: #{tpu_custom_call.1} parent=0
    _
  %s6 = ssub.s32 1, %s4
  %s7 = scalar_select 0, %s6, %s4
  $region1: #{tpu_custom_call.1} parent=0
    #allocation2 [shape = 'u8[262144]{0}', space=vmem, size = 0x40000, scoped, tag = 'input window, operand 0']
    #allocation3 [shape = 's32[2]{0}', space=sflag, size = 0x8, scoped, tag = 'scoped memory for tpu_custom_call.1']
    #allocation4 [shape = 's32[2]{0}', space=sflag, size = 0x8, scoped, tag = 'scoped memory for tpu_custom_call.1']
    #allocation5 [shape = 'u8[32768]{0}', space=vmem, size = 0x8000, scoped, tag = 'input window, operand 1, single buffered']
    #allocation6 [shape = 's32[1]{0}', space=sflag, size = 0x4, scoped, tag = 'scoped memory for tpu_custom_call.1']
    #allocation7 [shape = 'u8[131072]{0}', space=vmem, size = 0x20000, scoped, tag = 'output window, operand 0']
    %8 = vsyncpa [#allocation3], 0
    %s9 = scalar_lea.sflag [#allocation3], 1
    %10 = vsyncpa %s9, 0
    %11 = vsyncpa [#allocation6], 0
    %12 = vsyncpa [#allocation4], 0
    %s13 = scalar_lea.sflag [#allocation4], 1
    %14 = vsyncpa %s13, 0
    loop: start=0, step=1, limit=4
    $region2: #{tpu_custom_call.1} parent=1 // loop_pre_header
      _
    $region3: #{tpu_custom_call.1} parent=1 // loop_header
      %s16 = sphi 0, %s20
      %p17 = scmp.ge.s32.totalorder %s16, 4
      %s26 = sphi 0, %s28
      %s29 = sphi 0, %s26
      %s30 = sphi 0, %s29
      %s46 = sphi 0, %s30
      %s50 = sphi 0, %s50
      %s52 = sphi 0, %s50
      %s53 = sphi 0, %s52
      %s67 = sphi 0, %s53
      %s71 = sphi 0, %s71
      %s73 = sphi 0, %s71
      %s74 = sphi 0, %s73
      %s88 = sphi 0, %s74
      %s94 = sphi 0, %s96
      %s97 = sphi 0, %s94
      %s98 = sphi 0, %s97
      %s114 = sphi 0, %s98
    $region4: #{tpu_custom_call.1} parent=1 // loop_header_branch
      %19 = sbr.rel (%p17) target = $region8
    $region5: #{tpu_custom_call.1} parent=1 // loop_body
      %s21 = ssub.s32 %s16, 1
      %s22 = ssub.s32 %s16, 2
      %s23 = sadd.s32 %s16, 1
      %s24 = ssub.s32 %s16, %s23
      %p25 = scmp.eq.s32.totalorder %s24, 0
      %s27 = sadd.s32 %s26, 1
      %s28 = scalar_select %p25, %s26, %s27
      %p31 = pneg %p25
      %p32 = scmp.eq.s32.totalorder %s16, 1
      %p33 = por %p31, %p32
      %p34 = scmp.ne.s32.totalorder %s26, %s29
      %p35 = scmp.eq.s32.totalorder %s16, 0
      %p36 = por %p34, %p35
      %p37 = scmp.ne.s32.totalorder %s26, %s29
      %p38 = scmp.eq.s32.totalorder %s21, 1
      %p39 = por %p37, %p38
      %p40 = scmp.ne.s32.totalorder %s29, %s30
      %p41 = scmp.eq.s32.totalorder %s21, 0
      %p42 = por %p40, %p41
      %p43 = scmp.ne.s32.totalorder %s29, %s30
      %p44 = scmp.eq.s32.totalorder %s22, 1
      %p45 = por %p43, %p44
      %p47 = scmp.ne.s32.totalorder %s30, %s46
      %p48 = scmp.eq.s32.totalorder %s22, 0
      %p49 = por %p47, %p48
      %s51 = sadd.s32 %s50, 1
      %p54 = scmp.eq.s32.totalorder %s16, 1
      %p55 = scmp.ne.s32.totalorder %s50, %s52
      %p56 = scmp.eq.s32.totalorder %s16, 0
      %p57 = por %p55, %p56
      %p58 = scmp.ne.s32.totalorder %s50, %s52
      %p59 = scmp.eq.s32.totalorder %s21, 1
      %p60 = por %p58, %p59
      %p61 = scmp.ne.s32.totalorder %s52, %s53
      %p62 = scmp.eq.s32.totalorder %s21, 0
      %p63 = por %p61, %p62
      %p64 = scmp.ne.s32.totalorder %s52, %s53
      %p65 = scmp.eq.s32.totalorder %s22, 1
      %p66 = por %p64, %p65
      %p68 = scmp.ne.s32.totalorder %s53, %s67
      %p69 = scmp.eq.s32.totalorder %s22, 0
      %p70 = por %p68, %p69
      %s72 = sadd.s32 %s71, 1
      %p75 = scmp.eq.s32.totalorder %s16, 1
      %p76 = scmp.ne.s32.totalorder %s71, %s73
      %p77 = scmp.eq.s32.totalorder %s16, 0
      %p78 = por %p76, %p77
      %p79 = scmp.ne.s32.totalorder %s71, %s73
      %p80 = scmp.eq.s32.totalorder %s21, 1
      %p81 = por %p79, %p80
      %p82 = scmp.ne.s32.totalorder %s73, %s74
      %p83 = scmp.eq.s32.totalorder %s21, 0
      %p84 = por %p82, %p83
      %p85 = scmp.ne.s32.totalorder %s73, %s74
      %p86 = scmp.eq.s32.totalorder %s22, 1
      %p87 = por %p85, %p86
      %p89 = scmp.ne.s32.totalorder %s74, %s88
      %p90 = scmp.eq.s32.totalorder %s22, 0
      %p91 = por %p89, %p90
      %s92 = ssub.s32 %s16, %s23
      %p93 = scmp.eq.s32.totalorder %s92, 0
      %s95 = sadd.s32 %s94, 1
      %s96 = scalar_select %p93, %s94, %s95
      %p99 = pneg %p93
      %p100 = scmp.eq.s32.totalorder %s16, 1
      %p101 = por %p99, %p100
      %p102 = scmp.ne.s32.totalorder %s94, %s97
      %p103 = scmp.eq.s32.totalorder %s16, 0
      %p104 = por %p102, %p103
      %p105 = scmp.ne.s32.totalorder %s94, %s97
      %p106 = scmp.eq.s32.totalorder %s21, 1
      %p107 = por %p105, %p106
      %p108 = scmp.ne.s32.totalorder %s97, %s98
      %p109 = scmp.eq.s32.totalorder %s21, 0
      %p110 = por %p108, %p109
      %p111 = scmp.ne.s32.totalorder %s97, %s98
      %p112 = scmp.eq.s32.totalorder %s22, 1
      %p113 = por %p111, %p112
      %p115 = scmp.ne.s32.totalorder %s98, %s114
      %p116 = scmp.eq.s32.totalorder %s22, 0
      %p117 = por %p115, %p116
      %p118 = scmp.le.s32.totalorder 1, %s16
      %p119 = scmp.lt.s32.totalorder %s16, 3
      %p120 = pnand %p118, %p119
      %p121 = pneg %p120
      // Predicated region
      $region9: #{tpu_custom_call.1} parent=5 // pred_check
        _
      $region10: #{tpu_custom_call.1} parent=5 // pred_check_branch
        %123 = sbr.rel (%p120) target = $region12
      $region11: #{tpu_custom_call.1} parent=5 // pred_region
        %s124 = ssub.s32 %s16, 1
        // Predicated region
        $region13: #{tpu_custom_call.1} parent=11 // pred_check
          %p125 = pneg %p63
        $region14: #{tpu_custom_call.1} parent=11 // pred_check_branch
          %127 = sbr.rel (%p125) target = $region16
        $region15: #{tpu_custom_call.1} parent=11 // pred_region
          %s129 = ssub.s32 1024, 1024
          %130 = vsyncadd [#allocation6], %s129
          %s131 = sshll.u32 [#allocation5], 4
          %s132 = int_to_ptr.vmem [resolvable:$true] %s131
          %137 = dma.hbm_to_vmem [thread:$0]  %s1, 1024, %s132, [#allocation6], 64, 64, 4
        $region16: #{tpu_custom_call.1} parent=11 // pred_fallthru
          _
        // Predicated region
        $region17: #{tpu_custom_call.1} parent=11 // pred_check
          %p138 = pneg %p84
        $region18: #{tpu_custom_call.1} parent=11 // pred_check_branch
          %140 = sbr.rel (%p138) target = $region20
        $region19: #{tpu_custom_call.1} parent=11 // pred_region
          _
        $region20: #{tpu_custom_call.1} parent=11 // pred_fallthru
          _
      $region12: #{tpu_custom_call.1} parent=5 // pred_fallthru
        _
      %p141 = scmp.lt.s32.totalorder %s16, 2
      // Predicated region
      $region21: #{tpu_custom_call.1} parent=5 // pred_check
        %p142 = pneg %p141
      $region22: #{tpu_custom_call.1} parent=5 // pred_check_branch
        %144 = sbr.rel (%p142) target = $region24
      $region23: #{tpu_custom_call.1} parent=5 // pred_region
        // Predicated region
        $region25: #{tpu_custom_call.1} parent=23 // pred_check
          %p145 = pneg %p36
        $region26: #{tpu_custom_call.1} parent=23 // pred_check_branch
          %147 = sbr.rel (%p145) target = $region28
        $region27: #{tpu_custom_call.1} parent=23 // pred_region
          %s148 = sand.u32 %s26, 1
          %s149 = scalar_lea.sflag [#allocation3], %s148
          %s150 = sand.u32 %s26, 1
          %s151 = smul.addr %s150, 256
          %s152 = scalar_lea.vmem [#allocation2], %s151
          %s153 = smul.u32 32, %s16
          %s155 = ssub.s32 4096, 4096
          %156 = vsyncadd %s149, %s155
          %s157 = smul.addr %s153, 128
          %s158 = scalar_lea.hbm %s0, %s157
          %s159 = sshll.u32 %s152, 4
          %s160 = int_to_ptr.vmem [resolvable:$true] %s159
          %165 = dma.hbm_to_vmem [thread:$0]  %s158, 4096, %s160, %s149, 128, 128, 8
        $region28: #{tpu_custom_call.1} parent=23 // pred_fallthru
          _
      $region24: #{tpu_custom_call.1} parent=5 // pred_fallthru
        _
      %p166 = scmp.le.s32.totalorder 1, %s16
      %p167 = scmp.lt.s32.totalorder %s16, 3
      %p168 = pnand %p166, %p167
      %p169 = pneg %p168
      // Predicated region
      $region29: #{tpu_custom_call.1} parent=5 // pred_check
        _
      $region30: #{tpu_custom_call.1} parent=5 // pred_check_branch
        %171 = sbr.rel (%p168) target = $region32
      $region31: #{tpu_custom_call.1} parent=5 // pred_region
        %s172 = ssub.s32 %s16, 1
        %s173 = sand.u32 %s29, 1
        %s174 = scalar_lea.sflag [#allocation3], %s173
        %s175 = sand.u32 %s29, 1
        %s176 = smul.addr %s175, 256
        %s177 = scalar_lea.vmem [#allocation2], %s176
        // Predicated region
        $region33: #{tpu_custom_call.1} parent=31 // pred_check
          %p178 = pneg %p42
        $region34: #{tpu_custom_call.1} parent=31 // pred_check_branch
          %180 = sbr.rel (%p178) target = $region36
        $region35: #{tpu_custom_call.1} parent=31 // pred_region
          %181 = dma.done %s174, 4096
        $region36: #{tpu_custom_call.1} parent=31 // pred_fallthru
          _
        // Predicated region
        $region37: #{tpu_custom_call.1} parent=31 // pred_check
          %p182 = pneg %p63
        $region38: #{tpu_custom_call.1} parent=31 // pred_check_branch
          %184 = sbr.rel (%p182) target = $region40
        $region39: #{tpu_custom_call.1} parent=31 // pred_region
          %185 = dma.done [#allocation6], 1024
        $region40: #{tpu_custom_call.1} parent=31 // pred_fallthru
          _
        %s186 = sand.u32 %s29, 1
        %s187 = scalar_lea.sflag [#allocation3], %s186
        %s188 = sand.u32 %s29, 1
        %s189 = smul.addr %s188, 256
        %s190 = scalar_lea.vmem [#allocation2], %s189
        %p191 = pneg %p42
        %p192 = pneg %p39
        %p193 = pneg %p63
        %p194 = pneg %p60
        %p195 = pneg %p84
        %p196 = pneg %p81
        %p197 = pneg %p110
        %p198 = pneg %p107
        %s199 = sand.u32 %s97, 1
        %s200 = scalar_lea.sflag [#allocation4], %s199
        %s201 = sand.u32 %s97, 1
        %s202 = smul.addr %s201, 128
        %s203 = scalar_lea.vmem [#allocation7], %s202
        %s204 = smul.u32 32, %s21
        %s205 = smul.u32 32, %s21
        %v207 = vld [vmem:[%s177] sm:$0xff]
        %v208 = vld [vmem:[%s177 + $0x8] sm:$0xff]
        %v209 = vld [vmem:[%s177 + $0x10] sm:$0xff]
        %v210 = vld [vmem:[%s177 + $0x18] sm:$0xff]
        %v211 = vld [vmem:[%s177 + $0x20] sm:$0xff]
        %v212 = vld [vmem:[%s177 + $0x28] sm:$0xff]
        %v213 = vld [vmem:[%s177 + $0x30] sm:$0xff]
        %v214 = vld [vmem:[%s177 + $0x38] sm:$0xff]
        %v215 = vld [vmem:[%s177 + $0x40] sm:$0xff]
        %v216 = vld [vmem:[%s177 + $0x48] sm:$0xff]
        %v217 = vld [vmem:[%s177 + $0x50] sm:$0xff]
        %v218 = vld [vmem:[%s177 + $0x58] sm:$0xff]
        %v219 = vld [vmem:[%s177 + $0x60] sm:$0xff]
        %v220 = vld [vmem:[%s177 + $0x68] sm:$0xff]
        %v221 = vld [vmem:[%s177 + $0x70] sm:$0xff]
        %v222 = vld [vmem:[%s177 + $0x78] sm:$0xff]
        %v223 = vld [vmem:[%s177 + $0x80] sm:$0xff]
        %v224 = vld [vmem:[%s177 + $0x88] sm:$0xff]
        %v225 = vld [vmem:[%s177 + $0x90] sm:$0xff]
        %v226 = vld [vmem:[%s177 + $0x98] sm:$0xff]
        %v227 = vld [vmem:[%s177 + $0xa0] sm:$0xff]
        %v228 = vld [vmem:[%s177 + $0xa8] sm:$0xff]
        %v229 = vld [vmem:[%s177 + $0xb0] sm:$0xff]
        %v230 = vld [vmem:[%s177 + $0xb8] sm:$0xff]
        %v231 = vld [vmem:[%s177 + $0xc0] sm:$0xff]
        %v232 = vld [vmem:[%s177 + $0xc8] sm:$0xff]
        %v233 = vld [vmem:[%s177 + $0xd0] sm:$0xff]
        %v234 = vld [vmem:[%s177 + $0xd8] sm:$0xff]
        %v235 = vld [vmem:[%s177 + $0xe0] sm:$0xff]
        %v236 = vld [vmem:[%s177 + $0xe8] sm:$0xff]
        %v237 = vld [vmem:[%s177 + $0xf0] sm:$0xff]
        %v238 = vld [vmem:[%s177 + $0xf8] sm:$0xff]
        %v239 = vpack.c.bf16 %v208, %v207
        %v240 = vpack.c.bf16 %v210, %v209
        %v241 = vpack.c.bf16 %v212, %v211
        %v242 = vpack.c.bf16 %v214, %v213
        %v243 = vpack.c.bf16 %v216, %v215
        %v244 = vpack.c.bf16 %v218, %v217
        %v245 = vpack.c.bf16 %v220, %v219
        %v246 = vpack.c.bf16 %v222, %v221
        %v247 = vpack.c.bf16 %v224, %v223
        %v248 = vpack.c.bf16 %v226, %v225
        %v249 = vpack.c.bf16 %v228, %v227
        %v250 = vpack.c.bf16 %v230, %v229
        %v251 = vpack.c.bf16 %v232, %v231
        %v252 = vpack.c.bf16 %v234, %v233
        %v253 = vpack.c.bf16 %v236, %v235
        %v254 = vpack.c.bf16 %v238, %v237
        %v255 = vld [vmem:[#allocation5] sm:$0xf]
        %v256 = vld [vmem:[#allocation5 + $0x4] sm:$0xf]
        %v257 = vld [vmem:[#allocation5 + $0x8] sm:$0xf]
        %v258 = vld [vmem:[#allocation5 + $0xc] sm:$0xf]
        %v259 = vld [vmem:[#allocation5 + $0x10] sm:$0xf]
        %v260 = vld [vmem:[#allocation5 + $0x14] sm:$0xf]
        %v261 = vld [vmem:[#allocation5 + $0x18] sm:$0xf]
        %v262 = vld [vmem:[#allocation5 + $0x1c] sm:$0xf]
        %v263 = vld [vmem:[#allocation5 + $0x20] sm:$0xf]
        %v264 = vld [vmem:[#allocation5 + $0x24] sm:$0xf]
        %v265 = vld [vmem:[#allocation5 + $0x28] sm:$0xf]
        %v266 = vld [vmem:[#allocation5 + $0x2c] sm:$0xf]
        %v267 = vld [vmem:[#allocation5 + $0x30] sm:$0xf]
        %v268 = vld [vmem:[#allocation5 + $0x34] sm:$0xf]
        %v269 = vld [vmem:[#allocation5 + $0x38] sm:$0xf]
        %v270 = vld [vmem:[#allocation5 + $0x3c] sm:$0xf]
        %v271 = vld [vmem:[%s2] sm:$0x1]
        %v273 = vlaneseq
        %v274 = vshrl.u32 %v273, 7
        %v275 = vsub.s32 0, %v274
        %v276 = vrot.slane %v271, %v275
        %v294 = vunpack.c.l.b16 %v255
        %v295 = vunpack.c.l.b16 %v256
        %v296 = vunpack.c.l.b16 %v257
        %v297 = vunpack.c.l.b16 %v258
        %v298 = vunpack.c.l.b16 %v259
        %v299 = vunpack.c.l.b16 %v260
        %v300 = vunpack.c.l.b16 %v261
        %v301 = vunpack.c.l.b16 %v262
        %v302 = vunpack.c.l.b16 %v263
        %v303 = vunpack.c.l.b16 %v264
        %v304 = vunpack.c.l.b16 %v265
        %v305 = vunpack.c.l.b16 %v266
        %v306 = vunpack.c.l.b16 %v267
        %v307 = vunpack.c.l.b16 %v268
        %v308 = vunpack.c.l.b16 %v269
        %v309 = vunpack.c.l.b16 %v270
        %v310 = vpack.c.b16 %v295, %v294
        %v311 = vpack.c.b16 %v297, %v296
        %v312 = vpack.c.b16 %v299, %v298
        %v313 = vpack.c.b16 %v301, %v300
        %v314 = vpack.c.b16 %v303, %v302
        %v315 = vpack.c.b16 %v305, %v304
        %v316 = vpack.c.b16 %v307, %v306
        %v317 = vpack.c.b16 %v309, %v308
        %326 = vmatprep.subr.bf16.mxu0 0
        %327 = vmatpush1.bf16.msra.mxu0 %v310
        %328 = vmatprep.subr.bf16.mxu0 0
        %329 = vmatpush1.bf16.msra.mxu0 %v311
        %330 = vmatprep.subr.bf16.mxu0 0
        %331 = vmatpush1.bf16.msra.mxu0 %v312
        %332 = vmatprep.subr.bf16.mxu0 0
        %333 = vmatpush1.bf16.msra.mxu0 %v313
        %334 = vmatprep.subr.bf16.mxu0 0
        %335 = vmatpush1.bf16.msra.mxu0 %v314
        %336 = vmatprep.subr.bf16.mxu0 0
        %337 = vmatpush1.bf16.msra.mxu0 %v315
        %338 = vmatprep.subr.bf16.mxu0 0
        %339 = vmatpush1.bf16.msra.mxu0 %v316
        %340 = vmatprep.subr.bf16.mxu0 0
        %341 = vmatpush1.bf16.msra.mxu0 %v317
        %342 = vmatprep.subr.bf16.mxu0 0
        %343 = vmatpush1.bf16.msra.mxu0 0
        %344 = vmatprep.subr.bf16.mxu0 0
        %345 = vmatpush1.bf16.msra.mxu0 0
        %346 = vmatprep.subr.bf16.mxu0 0
        %347 = vmatpush1.bf16.msra.mxu0 0
        %348 = vmatprep.subr.bf16.mxu0 0
        %349 = vmatpush1.bf16.msra.mxu0 0
        %350 = vmatprep.subr.bf16.mxu0 0
        %351 = vmatpush1.bf16.msra.mxu0 0
        %352 = vmatprep.subr.bf16.mxu0 0
        %353 = vmatpush1.bf16.msra.mxu0 0
        %354 = vmatprep.subr.bf16.mxu0 0
        %355 = vmatpush1.bf16.msra.mxu0 0
        %356 = vmatprep.subr.bf16.mxu0 0
        %357 = vmatpush1.bf16.msra.mxu0 0
        %358 = vmatprep.mubr.bf16.mxu0 0
        %359 = vmatmul.mubr.bf16.gmra.mrb[0].mxu0 %v239
        %v360 = vpop.f32.mrb[0].mxu0
        %v361 = vadd.f32 %v276, %v360
        %v362 = vpop.f32.mrb[0].mxu0
        %v363 = vpop.f32.mrb[0].mxu0
        %v364 = vadd.f32 %v276, %v363
        %v365 = vpop.f32.mrb[0].mxu0
        %366 = vmatprep.mubr.bf16.mxu0 0
        %367 = vmatmul.mubr.bf16.gmra.mrb[0].mxu0 %v240
        %v368 = vpop.f32.mrb[0].mxu0
        %v369 = vadd.f32 %v276, %v368
        %v370 = vpop.f32.mrb[0].mxu0
        %v371 = vpop.f32.mrb[0].mxu0
        %v372 = vadd.f32 %v276, %v371
        %v373 = vpop.f32.mrb[0].mxu0
        %374 = vmatprep.mubr.bf16.mxu0 0
        %375 = vmatmul.mubr.bf16.gmra.mrb[0].mxu0 %v241
        %v376 = vpop.f32.mrb[0].mxu0
        %v377 = vadd.f32 %v276, %v376
        %v378 = vpop.f32.mrb[0].mxu0
        %v379 = vpop.f32.mrb[0].mxu0
        %v380 = vadd.f32 %v276, %v379
        %v381 = vpop.f32.mrb[0].mxu0
        %382 = vmatprep.mubr.bf16.mxu0 0
        %383 = vmatmul.mubr.bf16.gmra.mrb[0].mxu0 %v242
        %v384 = vpop.f32.mrb[0].mxu0
        %v385 = vadd.f32 %v276, %v384
        %v386 = vpop.f32.mrb[0].mxu0
        %v387 = vpop.f32.mrb[0].mxu0
        %v388 = vadd.f32 %v276, %v387
        %v389 = vpop.f32.mrb[0].mxu0
        %390 = vmatprep.mubr.bf16.mxu0 0
        %391 = vmatmul.mubr.bf16.gmra.mrb[0].mxu0 %v243
        %v392 = vpop.f32.mrb[0].mxu0
        %v393 = vadd.f32 %v276, %v392
        %v394 = vpop.f32.mrb[0].mxu0
        %v395 = vpop.f32.mrb[0].mxu0
        %v396 = vadd.f32 %v276, %v395
        %v397 = vpop.f32.mrb[0].mxu0
        %398 = vmatprep.mubr.bf16.mxu0 0
        %399 = vmatmul.mubr.bf16.gmra.mrb[0].mxu0 %v244
        %v400 = vpop.f32.mrb[0].mxu0
        %v401 = vadd.f32 %v276, %v400
        %v402 = vpop.f32.mrb[0].mxu0
        %v403 = vpop.f32.mrb[0].mxu0
        %v404 = vadd.f32 %v276, %v403
        %v405 = vpop.f32.mrb[0].mxu0
        %406 = vmatprep.mubr.bf16.mxu0 0
        %407 = vmatmul.mubr.bf16.gmra.mrb[0].mxu0 %v245
        %v408 = vpop.f32.mrb[0].mxu0
        %v409 = vadd.f32 %v276, %v408
        %v410 = vpop.f32.mrb[0].mxu0
        %v411 = vpop.f32.mrb[0].mxu0
        %v412 = vadd.f32 %v276, %v411
        %v413 = vpop.f32.mrb[0].mxu0
        %414 = vmatprep.mubr.bf16.mxu0 0
        %415 = vmatmul.mubr.bf16.gmra.mrb[0].mxu0 %v246
        %v416 = vpop.f32.mrb[0].mxu0
        %v417 = vadd.f32 %v276, %v416
        %v418 = vpop.f32.mrb[0].mxu0
        %v419 = vpop.f32.mrb[0].mxu0
        %v420 = vadd.f32 %v276, %v419
        %v421 = vpop.f32.mrb[0].mxu0
        %422 = vmatprep.mubr.bf16.mxu0 0
        %423 = vmatmul.mubr.bf16.gmra.mrb[0].mxu0 %v247
        %v424 = vpop.f32.mrb[0].mxu0
        %v425 = vadd.f32 %v276, %v424
        %v426 = vpop.f32.mrb[0].mxu0
        %v427 = vpop.f32.mrb[0].mxu0
        %v428 = vadd.f32 %v276, %v427
        %v429 = vpop.f32.mrb[0].mxu0
        %430 = vmatprep.mubr.bf16.mxu0 0
        %431 = vmatmul.mubr.bf16.gmra.mrb[0].mxu0 %v248
        %v432 = vpop.f32.mrb[0].mxu0
        %v433 = vadd.f32 %v276, %v432
        %v434 = vpop.f32.mrb[0].mxu0
        %v435 = vpop.f32.mrb[0].mxu0
        %v436 = vadd.f32 %v276, %v435
        %v437 = vpop.f32.mrb[0].mxu0
        %438 = vmatprep.mubr.bf16.mxu0 0
        %439 = vmatmul.mubr.bf16.gmra.mrb[0].mxu0 %v249
        %v440 = vpop.f32.mrb[0].mxu0
        %v441 = vadd.f32 %v276, %v440
        %v442 = vpop.f32.mrb[0].mxu0
        %v443 = vpop.f32.mrb[0].mxu0
        %v444 = vadd.f32 %v276, %v443
        %v445 = vpop.f32.mrb[0].mxu0
        %446 = vmatprep.mubr.bf16.mxu0 0
        %447 = vmatmul.mubr.bf16.gmra.mrb[0].mxu0 %v250
        %v448 = vpop.f32.mrb[0].mxu0
        %v449 = vadd.f32 %v276, %v448
        %v450 = vpop.f32.mrb[0].mxu0
        %v451 = vpop.f32.mrb[0].mxu0
        %v452 = vadd.f32 %v276, %v451
        %v453 = vpop.f32.mrb[0].mxu0
        %454 = vmatprep.mubr.bf16.mxu0 0
        %455 = vmatmul.mubr.bf16.gmra.mrb[0].mxu0 %v251
        %v456 = vpop.f32.mrb[0].mxu0
        %v457 = vadd.f32 %v276, %v456
        %v458 = vpop.f32.mrb[0].mxu0
        %v459 = vpop.f32.mrb[0].mxu0
        %v460 = vadd.f32 %v276, %v459
        %v461 = vpop.f32.mrb[0].mxu0
        %462 = vmatprep.mubr.bf16.mxu0 0
        %463 = vmatmul.mubr.bf16.gmra.mrb[0].mxu0 %v252
        %v464 = vpop.f32.mrb[0].mxu0
        %v465 = vadd.f32 %v276, %v464
        %v466 = vpop.f32.mrb[0].mxu0
        %v467 = vpop.f32.mrb[0].mxu0
        %v468 = vadd.f32 %v276, %v467
        %v469 = vpop.f32.mrb[0].mxu0
        %470 = vmatprep.mubr.bf16.mxu0 0
        %471 = vmatmul.mubr.bf16.gmra.mrb[0].mxu0 %v253
        %v472 = vpop.f32.mrb[0].mxu0
        %v473 = vadd.f32 %v276, %v472
        %v474 = vpop.f32.mrb[0].mxu0
        %v475 = vpop.f32.mrb[0].mxu0
        %v476 = vadd.f32 %v276, %v475
        %v477 = vpop.f32.mrb[0].mxu0
        %478 = vmatprep.mubr.bf16.mxu0 0
        %479 = vmatmul.mubr.bf16.gmra.mrb[0].mxu0 %v254
        %v480 = vpop.f32.mrb[0].mxu0
        %v481 = vadd.f32 %v276, %v480
        %v482 = vpop.f32.mrb[0].mxu0
        %v483 = vpop.f32.mrb[0].mxu0
        %v484 = vadd.f32 %v276, %v483
        %v485 = vpop.f32.mrb[0].mxu0
        %486 = vdwg.mxu0
        %v487 = vmax.f32 %v361, 0.0
        %v488 = vmax.f32 %v364, 0.0
        %v489 = vmax.f32 %v369, 0.0
        %v490 = vmax.f32 %v372, 0.0
        %v491 = vmax.f32 %v377, 0.0
        %v492 = vmax.f32 %v380, 0.0
        %v493 = vmax.f32 %v385, 0.0
        %v494 = vmax.f32 %v388, 0.0
        %v495 = vmax.f32 %v393, 0.0
        %v496 = vmax.f32 %v396, 0.0
        %v497 = vmax.f32 %v401, 0.0
        %v498 = vmax.f32 %v404, 0.0
        %v499 = vmax.f32 %v409, 0.0
        %v500 = vmax.f32 %v412, 0.0
        %v501 = vmax.f32 %v417, 0.0
        %v502 = vmax.f32 %v420, 0.0
        %v503 = vmax.f32 %v425, 0.0
        %v504 = vmax.f32 %v428, 0.0
        %v505 = vmax.f32 %v433, 0.0
        %v506 = vmax.f32 %v436, 0.0
        %v507 = vmax.f32 %v441, 0.0
        %v508 = vmax.f32 %v444, 0.0
        %v509 = vmax.f32 %v449, 0.0
        %v510 = vmax.f32 %v452, 0.0
        %v511 = vmax.f32 %v457, 0.0
        %v512 = vmax.f32 %v460, 0.0
        %v513 = vmax.f32 %v465, 0.0
        %v514 = vmax.f32 %v468, 0.0
        %v515 = vmax.f32 %v473, 0.0
        %v516 = vmax.f32 %v476, 0.0
        %v517 = vmax.f32 %v481, 0.0
        %v518 = vmax.f32 %v484, 0.0
        %v519 = vpack.c.bf16 %v488, %v487
        %v520 = vpack.c.bf16 %v490, %v489
        %v521 = vpack.c.bf16 %v492, %v491
        %v522 = vpack.c.bf16 %v494, %v493
        %v523 = vpack.c.bf16 %v496, %v495
        %v524 = vpack.c.bf16 %v498, %v497
        %v525 = vpack.c.bf16 %v500, %v499
        %v526 = vpack.c.bf16 %v502, %v501
        %v527 = vpack.c.bf16 %v504, %v503
        %v528 = vpack.c.bf16 %v506, %v505
        %v529 = vpack.c.bf16 %v508, %v507
        %v530 = vpack.c.bf16 %v510, %v509
        %v531 = vpack.c.bf16 %v512, %v511
        %v532 = vpack.c.bf16 %v514, %v513
        %v533 = vpack.c.bf16 %v516, %v515
        %v534 = vpack.c.bf16 %v518, %v517
        %v551 = vunpack.c.l.b16 %v519
        %v552 = vunpack.c.h.b16 %v519
        %v553 = vunpack.c.l.b16 %v520
        %v554 = vunpack.c.h.b16 %v520
        %v555 = vunpack.c.l.b16 %v521
        %v556 = vunpack.c.h.b16 %v521
        %v557 = vunpack.c.l.b16 %v522
        %v558 = vunpack.c.h.b16 %v522
        %v559 = vunpack.c.l.b16 %v523
        %v560 = vunpack.c.h.b16 %v523
        %v561 = vunpack.c.l.b16 %v524
        %v562 = vunpack.c.h.b16 %v524
        %v563 = vunpack.c.l.b16 %v525
        %v564 = vunpack.c.h.b16 %v525
        %v565 = vunpack.c.l.b16 %v526
        %v566 = vunpack.c.h.b16 %v526
        %v567 = vunpack.c.l.b16 %v527
        %v568 = vunpack.c.h.b16 %v527
        %v569 = vunpack.c.l.b16 %v528
        %v570 = vunpack.c.h.b16 %v528
        %v571 = vunpack.c.l.b16 %v529
        %v572 = vunpack.c.h.b16 %v529
        %v573 = vunpack.c.l.b16 %v530
        %v574 = vunpack.c.h.b16 %v530
        %v575 = vunpack.c.l.b16 %v531
        %v576 = vunpack.c.h.b16 %v531
        %v577 = vunpack.c.l.b16 %v532
        %v578 = vunpack.c.h.b16 %v532
        %v579 = vunpack.c.l.b16 %v533
        %v580 = vunpack.c.h.b16 %v533
        %v581 = vunpack.c.l.b16 %v534
        %v582 = vunpack.c.h.b16 %v534
        %v583 = vpack.c.b16 %v551, %v551
        %v584 = vpack.c.b16 %v552, %v552
        %v585 = vpack.c.b16 %v553, %v553
        %v586 = vpack.c.b16 %v554, %v554
        %v587 = vpack.c.b16 %v555, %v555
        %v588 = vpack.c.b16 %v556, %v556
        %v589 = vpack.c.b16 %v557, %v557
        %v590 = vpack.c.b16 %v558, %v558
        %v591 = vpack.c.b16 %v559, %v559
        %v592 = vpack.c.b16 %v560, %v560
        %v593 = vpack.c.b16 %v561, %v561
        %v594 = vpack.c.b16 %v562, %v562
        %v595 = vpack.c.b16 %v563, %v563
        %v596 = vpack.c.b16 %v564, %v564
        %v597 = vpack.c.b16 %v565, %v565
        %v598 = vpack.c.b16 %v566, %v566
        %v599 = vpack.c.b16 %v567, %v567
        %v600 = vpack.c.b16 %v568, %v568
        %v601 = vpack.c.b16 %v569, %v569
        %v602 = vpack.c.b16 %v570, %v570
        %v603 = vpack.c.b16 %v571, %v571
        %v604 = vpack.c.b16 %v572, %v572
        %v605 = vpack.c.b16 %v573, %v573
        %v606 = vpack.c.b16 %v574, %v574
        %v607 = vpack.c.b16 %v575, %v575
        %v608 = vpack.c.b16 %v576, %v576
        %v609 = vpack.c.b16 %v577, %v577
        %v610 = vpack.c.b16 %v578, %v578
        %v611 = vpack.c.b16 %v579, %v579
        %v612 = vpack.c.b16 %v580, %v580
        %v613 = vpack.c.b16 %v581, %v581
        %v614 = vpack.c.b16 %v582, %v582
        %647 = vst [vmem:[%s203] sm:$0xf] %v583
        %648 = vst [vmem:[%s203 + $0x4] sm:$0xf] %v584
        %649 = vst [vmem:[%s203 + $0x8] sm:$0xf] %v585
        %650 = vst [vmem:[%s203 + $0xc] sm:$0xf] %v586
        %651 = vst [vmem:[%s203 + $0x10] sm:$0xf] %v587
        %652 = vst [vmem:[%s203 + $0x14] sm:$0xf] %v588
        %653 = vst [vmem:[%s203 + $0x18] sm:$0xf] %v589
        %654 = vst [vmem:[%s203 + $0x1c] sm:$0xf] %v590
        %655 = vst [vmem:[%s203 + $0x20] sm:$0xf] %v591
        %656 = vst [vmem:[%s203 + $0x24] sm:$0xf] %v592
        %657 = vst [vmem:[%s203 + $0x28] sm:$0xf] %v593
        %658 = vst [vmem:[%s203 + $0x2c] sm:$0xf] %v594
        %659 = vst [vmem:[%s203 + $0x30] sm:$0xf] %v595
        %660 = vst [vmem:[%s203 + $0x34] sm:$0xf] %v596
        %661 = vst [vmem:[%s203 + $0x38] sm:$0xf] %v597
        %662 = vst [vmem:[%s203 + $0x3c] sm:$0xf] %v598
        %663 = vst [vmem:[%s203 + $0x40] sm:$0xf] %v599
        %664 = vst [vmem:[%s203 + $0x44] sm:$0xf] %v600
        %665 = vst [vmem:[%s203 + $0x48] sm:$0xf] %v601
        %666 = vst [vmem:[%s203 + $0x4c] sm:$0xf] %v602
        %667 = vst [vmem:[%s203 + $0x50] sm:$0xf] %v603
        %668 = vst [vmem:[%s203 + $0x54] sm:$0xf] %v604
        %669 = vst [vmem:[%s203 + $0x58] sm:$0xf] %v605
        %670 = vst [vmem:[%s203 + $0x5c] sm:$0xf] %v606
        %671 = vst [vmem:[%s203 + $0x60] sm:$0xf] %v607
        %672 = vst [vmem:[%s203 + $0x64] sm:$0xf] %v608
        %673 = vst [vmem:[%s203 + $0x68] sm:$0xf] %v609
        %674 = vst [vmem:[%s203 + $0x6c] sm:$0xf] %v610
        %675 = vst [vmem:[%s203 + $0x70] sm:$0xf] %v611
        %676 = vst [vmem:[%s203 + $0x74] sm:$0xf] %v612
        %677 = vst [vmem:[%s203 + $0x78] sm:$0xf] %v613
        %678 = vst [vmem:[%s203 + $0x7c] sm:$0xf] %v614
        %s679 = sand.u32 %s97, 1
        %s680 = scalar_lea.sflag [#allocation4], %s679
        %s681 = sand.u32 %s97, 1
        %s682 = smul.addr %s681, 128
        %s683 = scalar_lea.vmem [#allocation7], %s682
        // Predicated region
        $region41: #{tpu_custom_call.1} parent=31 // pred_check
          %p684 = pneg %p107
        $region42: #{tpu_custom_call.1} parent=31 // pred_check_branch
          %686 = sbr.rel (%p684) target = $region44
        $region43: #{tpu_custom_call.1} parent=31 // pred_region
          %s687 = smul.u32 32, %s21
          %s689 = ssub.s32 2048, 2048
          %690 = vsyncadd %s680, %s689
          %s691 = smul.addr %s687, 64
          %s692 = scalar_lea.hbm %s3, %s691
          %s693 = sshll.u32 %s683, 4
          %s694 = int_to_ptr.vmem [resolvable:$true] %s693
          %699 = dma.vmem_to_hbm [thread:$0]  %s694, 2048, %s692, %s680, 64, 64, 4
        $region44: #{tpu_custom_call.1} parent=31 // pred_fallthru
          _
      $region32: #{tpu_custom_call.1} parent=5 // pred_fallthru
        _
      %p700 = scmp.le.s32.totalorder 2, %s16
      // Predicated region
      $region45: #{tpu_custom_call.1} parent=5 // pred_check
        %p701 = pneg %p700
      $region46: #{tpu_custom_call.1} parent=5 // pred_check_branch
        %703 = sbr.rel (%p701) target = $region48
      $region47: #{tpu_custom_call.1} parent=5 // pred_region
        %s704 = ssub.s32 %s16, 2
        // Predicated region
        $region49: #{tpu_custom_call.1} parent=47 // pred_check
          %p705 = pneg %p113
        $region50: #{tpu_custom_call.1} parent=47 // pred_check_branch
          %707 = sbr.rel (%p705) target = $region52
        $region51: #{tpu_custom_call.1} parent=47 // pred_region
          %s708 = sand.u32 %s98, 1
          %s709 = scalar_lea.sflag [#allocation4], %s708
          %s710 = sand.u32 %s98, 1
          %s711 = smul.addr %s710, 128
          %s712 = scalar_lea.vmem [#allocation7], %s711
          %713 = dma.done %s709, 2048
        $region52: #{tpu_custom_call.1} parent=47 // pred_fallthru
          _
      $region48: #{tpu_custom_call.1} parent=5 // pred_fallthru
        _
    $region6: #{tpu_custom_call.1} parent=1 // loop_footer
      %s20 = sadd.s32 1, %s16
    $region7: #{tpu_custom_call.1} parent=1 // loop_footer_branch
      %15 = sbr.rel target = $region3
    $region8: #{tpu_custom_call.1} parent=1 // loop_exit
      _
    %714 = vsyncpa [#allocation3], 1
    %s715 = scalar_lea.sflag [#allocation3], 1
    %716 = vsyncpa %s715, 1
    %717 = vsyncpa [#allocation6], 1
    %718 = vsyncpa [#allocation4], 1
    %s719 = scalar_lea.sflag [#allocation4], 1
    %720 = vsyncpa %s719, 1

</llo_original>
